<compile_context>
chip_gen: v7x
topology: tpu7x:2x2x1
jax: 0.10.0
libtpu: 0.0.40
codegen_flags: <defaults>
</compile_context>

<pallas_src>
import functools

import jax
import jax.numpy as jnp
from jax import lax
from jax.experimental import pallas as pl
from jax.experimental.pallas import tpu as pltpu


def _round_up(x, m):
    return (x + m - 1) // m * m


def _self_output_kernel(x_ref, res_ref, w_ref, b_ref, g_ref, beta_ref, o_ref,
                        *, eps, h_real):
    # x_ref:    (TR, Hp)  tile of hidden_states rows
    # res_ref:  (TR, Hp)  tile of input_tensor (residual) rows
    # w_ref:    (Hp, Hp)  dense weight, [in, out] layout (zero-padded)
    # b_ref:    (1, Hp)   dense bias
    # g_ref:    (1, Hp)   LayerNorm gamma
    # beta_ref: (1, Hp)   LayerNorm beta
    # o_ref:    (TR, Hp)  output tile

    # Dense: MXU matmul in the operands' native dtype, f32 accumulation.
    h = jnp.dot(x_ref[...], w_ref[...], preferred_element_type=jnp.float32)
    y = (h + b_ref[...].astype(jnp.float32)
           + res_ref[...].astype(jnp.float32))

    # Dropout is identity at inference.
    # TODO(synk): training-mode dropout would need pltpu.prng_seed/prng_random_bits.

    h_pad = y.shape[-1]
    inv_h = 1.0 / float(h_real)  # static compile-time constant
    mean = jnp.sum(y, axis=-1, keepdims=True) * inv_h
    centered = y - mean
    if h_pad != h_real:
        # Lane-padded columns are zero in y but become (-mean) after centering:
        # mask them out of the variance reduction only.
        col = lax.broadcasted_iota(jnp.int32, y.shape, 1)
        sq = jnp.where(col < h_real, centered * centered, 0.0)
    else:
        sq = centered * centered
    var = jnp.sum(sq, axis=-1, keepdims=True) * inv_h

    # Fold gamma into the per-row normalization scale.
    scale = g_ref[...].astype(jnp.float32) * lax.rsqrt(var + eps)
    out = centered * scale + beta_ref[...].astype(jnp.float32)
    o_ref[...] = out.astype(o_ref.dtype)


def _working_set_bytes(tile, h_pad, act_isz, w_isz):
    acts = 2 * 3 * tile * h_pad * act_isz       # double-buffered x / res / out tiles
    wgt = 2 * h_pad * h_pad * w_isz             # weight block is double-buffered too
    vecs = 2 * 3 * h_pad * max(act_isz, 4)      # bias / gamma / beta rows
    return acts + wgt + vecs


def protein_bert_self_output(hidden_states, input_tensor, weight_t, bias,
                             gamma, beta, *, eps=1e-12, row_tile=512,
                             vmem_budget_bytes=44 * 1024 * 1024):
    """hidden_states, input_tensor: [B, S, H]; weight_t: [H, H] ([in, out])."""
    B, S, H = hidden_states.shape
    R = B * S
    H_pad = _round_up(H, 128)                   # lane-dense output stores

    act_isz = jnp.dtype(hidden_states.dtype).itemsize
    w_isz = jnp.dtype(weight_t.dtype).itemsize

    # Pick the row tile: as large as requested, but no larger than the (8-padded)
    # row count and shrunk (floor 128) if the double-buffered working set would
    # blow the VMEM budget.
    tile = max(8, _round_up(min(row_tile, _round_up(R, 8)), 8))
    while tile > 128 and _working_set_bytes(tile, H_pad, act_isz, w_isz) > vmem_budget_bytes:
        tile = max(128, tile // 2)
    # TODO(synk): for very large H (>= 2048) add K/N tiling of the weight with a
    # reduction grid axis + VMEM accumulator instead of a full H x H resident block.

    R_pad = _round_up(R, tile)

    x2 = jnp.pad(hidden_states.reshape(R, H), ((0, R_pad - R), (0, H_pad - H)))
    r2 = jnp.pad(input_tensor.reshape(R, H), ((0, R_pad - R), (0, H_pad - H)))
    w2 = jnp.pad(weight_t, ((0, H_pad - H), (0, H_pad - H)))
    b2 = jnp.pad(bias, (0, H_pad - H)).reshape(1, H_pad)
    g2 = jnp.pad(gamma, (0, H_pad - H)).reshape(1, H_pad)
    be2 = jnp.pad(beta, (0, H_pad - H)).reshape(1, H_pad)

    ws = _working_set_bytes(tile, H_pad, act_isz, w_isz)
    vmem_limit = int(min(max(ws * 5 // 4 + (2 << 20), 16 << 20), 64 << 20))

    grid = (R_pad // tile,)

    out = pl.pallas_call(
        functools.partial(_self_output_kernel, eps=eps, h_real=H),
        out_shape=jax.ShapeDtypeStruct((R_pad, H_pad), hidden_states.dtype),
        grid_spec=pltpu.PrefetchScalarGridSpec(
            num_scalar_prefetch=0,
            grid=grid,
            in_specs=[
                pl.BlockSpec((tile, H_pad), lambda i: (i, 0)),   # x rows
                pl.BlockSpec((tile, H_pad), lambda i: (i, 0)),   # residual rows
                pl.BlockSpec((H_pad, H_pad), lambda i: (0, 0)),  # weight (full)
                pl.BlockSpec((1, H_pad), lambda i: (0, 0)),      # bias
                pl.BlockSpec((1, H_pad), lambda i: (0, 0)),      # gamma
                pl.BlockSpec((1, H_pad), lambda i: (0, 0)),      # beta
            ],
            out_specs=pl.BlockSpec((tile, H_pad), lambda i: (i, 0)),
        ),
        compiler_params=pltpu.CompilerParams(
            dimension_semantics=("parallel",),
            vmem_limit_bytes=vmem_limit),
    )(x2, r2, w2, b2, g2, be2)

    return out[:R, :H].reshape(B, S, H)


def _reference(hidden_states, input_tensor, weight_t, bias, gamma, beta, eps=1e-12):
    h = jnp.einsum("bsh,hk->bsk", hidden_states.astype(jnp.float32),
                   weight_t.astype(jnp.float32)) + bias.astype(jnp.float32)
    y = h + input_tensor.astype(jnp.float32)
    mean = jnp.mean(y, axis=-1, keepdims=True)
    var = jnp.mean((y - mean) ** 2, axis=-1, keepdims=True)
    return (y - mean) * lax.rsqrt(var + eps) * gamma + beta


if __name__ == "__main__":
    B, S, H = 2, 8, 32   # toy shapes; real BERT hidden sizes (768/1024) are
                         # already multiples of 128 and need no lane padding.
    key = jax.random.PRNGKey(0)
    k1, k2, k3, k4, k5, k6 = jax.random.split(key, 6)

    hidden_states = jax.random.normal(k1, (B, S, H), dtype=jnp.float32)
    input_tensor = jax.random.normal(k2, (B, S, H), dtype=jnp.float32)

    # nn.Linear(H, H): weight [out, in], bias [out]. Store transposed [in, out].
    bound = 1.0 / (H ** 0.5)
    weight = jax.random.uniform(k3, (H, H), minval=-bound, maxval=bound,
                                dtype=jnp.float32)
    weight_t = weight.T
    bias = jax.random.uniform(k4, (H,), minval=-bound, maxval=bound,
                              dtype=jnp.float32)
    # LayerNorm params (torch init is ones/zeros; perturb so the affine path is
    # actually exercised).
    gamma = jnp.ones((H,), jnp.float32) + 0.01 * jax.random.normal(k5, (H,))
    beta = 0.01 * jax.random.normal(k6, (H,), dtype=jnp.float32)

    out = protein_bert_self_output(hidden_states, input_tensor, weight_t, bias,
                                   gamma, beta, eps=1e-12)
    out = jax.block_until_ready(out)

    ref = _reference(hidden_states, input_tensor, weight_t, bias, gamma, beta)
    assert out.shape == (B, S, H)
    assert jnp.allclose(out, ref, atol=1e-5, rtol=1e-5), "mismatch vs reference"

    print("KERNEL_OK")
</pallas_src>

<mosaic_0001>
module attributes {stable_mosaic.version = 11 : i64} {
  func.func @_self_output_kernel(%arg0: i32, %arg1: memref<16x128xf32, #tpu.memory_space<vmem>>, %arg2: memref<16x128xf32, #tpu.memory_space<vmem>>, %arg3: memref<128x128xf32, #tpu.memory_space<vmem>>, %arg4: memref<1x128xf32, #tpu.memory_space<vmem>>, %arg5: memref<1x128xf32, #tpu.memory_space<vmem>>, %arg6: memref<1x128xf32, #tpu.memory_space<vmem>>, %arg7: memref<16x128xf32, #tpu.memory_space<vmem>>) attributes {dimension_semantics = [#tpu.dimension_semantics<parallel>], iteration_bounds = array<i64: 1>, scalar_prefetch = 0 : i64, scratch_operands = 0 : i64, tpu.core_type = #tpu.core_type<tc>, window_params = [{transform_indices = @transform_0, window_bounds = array<i64: 16, 128>}, {transform_indices = @transform_1, window_bounds = array<i64: 16, 128>}, {pipeline_mode = #tpu.pipeline_mode<synchronous>, transform_indices = @transform_2, window_bounds = array<i64: 128, 128>}, {pipeline_mode = #tpu.pipeline_mode<synchronous>, transform_indices = @transform_3, window_bounds = array<i64: 1, 128>}, {pipeline_mode = #tpu.pipeline_mode<synchronous>, transform_indices = @transform_4, window_bounds = array<i64: 1, 128>}, {pipeline_mode = #tpu.pipeline_mode<synchronous>, transform_indices = @transform_5, window_bounds = array<i64: 1, 128>}, {transform_indices = @transform_6, window_bounds = array<i64: 16, 128>}]} {
    %c0 = arith.constant 0 : index
    %c0_0 = arith.constant 0 : index
    %0 = vector.load %arg1[%c0, %c0_0] : memref<16x128xf32, #tpu.memory_space<vmem>>, vector<16x128xf32>
    %c0_1 = arith.constant 0 : index
    %c0_2 = arith.constant 0 : index
    %1 = vector.load %arg3[%c0_1, %c0_2] : memref<128x128xf32, #tpu.memory_space<vmem>>, vector<128x128xf32>
    %cst = arith.constant dense<0.000000e+00> : vector<16x128xf32>
    %2 = tpu.matmul %0, %1, %cst {dimension_numbers = #tpu.dot_dimension_numbers<[1], [0], [0], [1], [0, 0, 1, 1], [], []>} : vector<16x128xf32>, vector<128x128xf32>, vector<16x128xf32> -> vector<16x128xf32>
    %c0_3 = arith.constant 0 : index
    %c0_4 = arith.constant 0 : index
    %3 = vector.load %arg4[%c0_3, %c0_4] : memref<1x128xf32, #tpu.memory_space<vmem>>, vector<1x128xf32>
    %4 = vector.broadcast %3 : vector<1x128xf32> to vector<16x128xf32>
    %5 = arith.addf %2, %4 : vector<16x128xf32>
    %c0_5 = arith.constant 0 : index
    %c0_6 = arith.constant 0 : index
    %6 = vector.load %arg2[%c0_5, %c0_6] : memref<16x128xf32, #tpu.memory_space<vmem>>, vector<16x128xf32>
    %7 = arith.addf %5, %6 : vector<16x128xf32>
    %cst_7 = arith.constant dense<0.000000e+00> : vector<16xf32>
    %8 = vector.multi_reduction <add>, %7, %cst_7 [1] : vector<16x128xf32> to vector<16xf32>
    %9 = vector.shape_cast %8 : vector<16xf32> to vector<16x1xf32>
    %cst_8 = arith.constant 3.125000e-02 : f32
    %10 = vector.broadcast %cst_8 : f32 to vector<16x1xf32>
    %11 = arith.mulf %9, %10 : vector<16x1xf32>
    %12 = vector.broadcast %11 : vector<16x1xf32> to vector<16x128xf32>
    %13 = arith.subf %7, %12 : vector<16x128xf32>
    %14 = tpu.iota {dimensions = array<i32: 1>} : vector<16x128xi32>
    %c32_i32 = arith.constant 32 : i32
    %15 = vector.broadcast %c32_i32 : i32 to vector<16x128xi32>
    %16 = arith.cmpi slt, %14, %15 : vector<16x128xi32>
    %17 = arith.mulf %13, %13 : vector<16x128xf32>
    %cst_9 = arith.constant 0.000000e+00 : f32
    %18 = vector.broadcast %cst_9 : f32 to vector<16x128xf32>
    %19 = arith.select %16, %17, %18 : vector<16x128xi1>, vector<16x128xf32>
    %cst_10 = arith.constant dense<0.000000e+00> : vector<16xf32>
    %20 = vector.multi_reduction <add>, %19, %cst_10 [1] : vector<16x128xf32> to vector<16xf32>
    %21 = vector.shape_cast %20 : vector<16xf32> to vector<16x1xf32>
    %cst_11 = arith.constant 3.125000e-02 : f32
    %22 = vector.broadcast %cst_11 : f32 to vector<16x1xf32>
    %23 = arith.mulf %21, %22 : vector<16x1xf32>
    %c0_12 = arith.constant 0 : index
    %c0_13 = arith.constant 0 : index
    %24 = vector.load %arg5[%c0_12, %c0_13] : memref<1x128xf32, #tpu.memory_space<vmem>>, vector<1x128xf32>
    %cst_14 = arith.constant 9.99999996E-13 : f32
    %25 = vector.broadcast %cst_14 : f32 to vector<16x1xf32>
    %26 = arith.addf %23, %25 : vector<16x1xf32>
    %27 = math.rsqrt %26 : vector<16x1xf32>
    %28 = vector.broadcast %24 : vector<1x128xf32> to vector<16x128xf32>
    %29 = vector.broadcast %27 : vector<16x1xf32> to vector<16x128xf32>
    %30 = arith.mulf %28, %29 : vector<16x128xf32>
    %31 = arith.mulf %13, %30 : vector<16x128xf32>
    %c0_15 = arith.constant 0 : index
    %c0_16 = arith.constant 0 : index
    %32 = vector.load %arg6[%c0_15, %c0_16] : memref<1x128xf32, #tpu.memory_space<vmem>>, vector<1x128xf32>
    %33 = vector.broadcast %32 : vector<1x128xf32> to vector<16x128xf32>
    %34 = arith.addf %31, %33 : vector<16x128xf32>
    %c0_17 = arith.constant 0 : index
    %c0_18 = arith.constant 0 : index
    %35 = vector.load %arg7[%c0_17, %c0_18] : memref<16x128xf32, #tpu.memory_space<vmem>>, vector<16x128xf32>
    tpu.vector_store %arg7[%c0_17, %c0_18], %34 {strides = array<i32>} : memref<16x128xf32, #tpu.memory_space<vmem>>, vector<16x128xf32>,
    return
  }
  func.func @transform_0(%arg0: i32) -> (i32, i32) {
    %c0_i32 = arith.constant 0 : i32
    %c0_i32_0 = arith.constant 0 : i32
    return %arg0, %c0_i32 : i32, i32
  }
  func.func @transform_1(%arg0: i32) -> (i32, i32) {
    %c0_i32 = arith.constant 0 : i32
    %c0_i32_0 = arith.constant 0 : i32
    return %arg0, %c0_i32 : i32, i32
  }
  func.func @transform_2(%arg0: i32) -> (i32, i32) {
    %c0_i32 = arith.constant 0 : i32
    %c0_i32_0 = arith.constant 0 : i32
    %c0_i32_1 = arith.constant 0 : i32
    return %c0_i32, %c0_i32_0 : i32, i32
  }
  func.func @transform_3(%arg0: i32) -> (i32, i32) {
    %c0_i32 = arith.constant 0 : i32
    %c0_i32_0 = arith.constant 0 : i32
    %c0_i32_1 = arith.constant 0 : i32
    return %c0_i32, %c0_i32_0 : i32, i32
  }
  func.func @transform_4(%arg0: i32) -> (i32, i32) {
    %c0_i32 = arith.constant 0 : i32
    %c0_i32_0 = arith.constant 0 : i32
    %c0_i32_1 = arith.constant 0 : i32
    return %c0_i32, %c0_i32_0 : i32, i32
  }
  func.func @transform_5(%arg0: i32) -> (i32, i32) {
    %c0_i32 = arith.constant 0 : i32
    %c0_i32_0 = arith.constant 0 : i32
    %c0_i32_1 = arith.constant 0 : i32
    return %c0_i32, %c0_i32_0 : i32, i32
  }
  func.func @transform_6(%arg0: i32) -> (i32, i32) {
    %c0_i32 = arith.constant 0 : i32
    %c0_i32_0 = arith.constant 0 : i32
    return %arg0, %c0_i32 : i32, i32
  }
}

</mosaic_0001>

<llo_original>
// kernel: tpu_custom_call.1
$region0: #{tpu_custom_call.1}
  #allocation0 [shape = 'u32[]', space=smem, size = 0x4, offset = 0x4, fixed_abs, tag = 'smem constant byte address 0x4 - core index']
  #allocation1 [shape = 'u32[144,128]{1,0:T(1,128)}', space=vmem, size = 0x12000, scoped, tag = 'internal scratch']
  %s0 = inlined_call_operand.hbm [shape: f32[16,128], index: 0, kind: input, shape index: {}]
  %s1 = inlined_call_operand.hbm [shape: f32[16,128], index: 1, kind: input, shape index: {}]
  %s2 = inlined_call_operand.hbm [shape: f32[128,128], index: 2, kind: input, shape index: {}]
  %s3 = inlined_call_operand.vmem [shape: f32[1,128], index: 3, kind: input, shape index: {}]
  %s4 = inlined_call_operand.vmem [shape: f32[1,128], index: 4, kind: input, shape index: {}]
  %s5 = inlined_call_operand.vmem [shape: f32[1,128], index: 5, kind: input, shape index: {}]
  %s6 = inlined_call_operand.hbm [shape: f32[16,128], index: 6, kind: output, shape index: {}]
  %s7 = sld [smem:[#allocation0]]
  $region46: #{tpu_custom_call.1} parent=0
    _
  %s9 = ssub.s32 1, %s7
  %s10 = scalar_select 0, %s9, %s7
  $region1: #{tpu_custom_call.1} parent=0
    #allocation2 [shape = 'u8[8192]{0}', space=vmem, size = 0x2000, scoped, tag = 'input window, operand 0, single buffered']
    #allocation3 [shape = 's32[1]{0}', space=sflag, size = 0x4, scoped, tag = 'scoped memory for tpu_custom_call.1']
    #allocation4 [shape = 's32[1]{0}', space=sflag, size = 0x4, scoped, tag = 'scoped memory for tpu_custom_call.1']
    #allocation5 [shape = 'u8[8192]{0}', space=vmem, size = 0x2000, scoped, tag = 'input window, operand 1, single buffered']
    #allocation6 [shape = 's32[1]{0}', space=sflag, size = 0x4, scoped, tag = 'scoped memory for tpu_custom_call.1']
    #allocation7 [shape = 'u8[65536]{0}', space=vmem, size = 0x10000, scoped, tag = 'input window, operand 2, single buffered']
    #allocation8 [shape = 'u8[8192]{0}', space=vmem, size = 0x2000, scoped, tag = 'output window, operand 0, single buffered']
    %11 = vsyncpa [#allocation3], 0
    %12 = vsyncpa [#allocation6], 0
    %13 = vsyncpa [#allocation4], 0
    // Predicated region
    $region2: #{tpu_custom_call.1} parent=1 // pred_check
      _
    $region3: #{tpu_custom_call.1} parent=1 // pred_check_branch
      %15 = sbr.rel (0) target = $region5
    $region4: #{tpu_custom_call.1} parent=1 // pred_region
      %s17 = ssub.s32 256, 256
      %18 = vsyncadd [#allocation3], %s17
      %s19 = sshll.u32 [#allocation2], 4
      %s20 = int_to_ptr.vmem [resolvable:$true] %s19
      %25 = dma.hbm_to_vmem [thread:$0]  %s0, 256, %s20, [#allocation3], 128, 128, 8
    $region5: #{tpu_custom_call.1} parent=1 // pred_fallthru
      _
    // Predicated region
    $region6: #{tpu_custom_call.1} parent=1 // pred_check
      _
    $region7: #{tpu_custom_call.1} parent=1 // pred_check_branch
      %27 = sbr.rel (0) target = $region9
    $region8: #{tpu_custom_call.1} parent=1 // pred_region
      %s29 = ssub.s32 256, 256
      %30 = vsyncadd [#allocation6], %s29
      %s31 = sshll.u32 [#allocation5], 4
      %s32 = int_to_ptr.vmem [resolvable:$true] %s31
      %37 = dma.hbm_to_vmem [thread:$0]  %s1, 256, %s32, [#allocation6], 128, 128, 8
    $region9: #{tpu_custom_call.1} parent=1 // pred_fallthru
      _
    // Predicated region
    $region10: #{tpu_custom_call.1} parent=1 // pred_check
      _
    $region11: #{tpu_custom_call.1} parent=1 // pred_check_branch
      %39 = sbr.rel (0) target = $region13
    $region12: #{tpu_custom_call.1} parent=1 // pred_region
      %s41 = ssub.s32 2048, 2048
      %42 = vsyncadd [#allocation6], %s41
      %s43 = sshll.u32 [#allocation7], 4
      %s44 = int_to_ptr.vmem [resolvable:$true] %s43
      %49 = dma.hbm_to_vmem [thread:$0]  %s2, 2048, %s44, [#allocation6], 128, 128, 8
    $region13: #{tpu_custom_call.1} parent=1 // pred_fallthru
      _
    // Predicated region
    $region14: #{tpu_custom_call.1} parent=1 // pred_check
      _
    $region15: #{tpu_custom_call.1} parent=1 // pred_check_branch
      %51 = sbr.rel (0) target = $region17
    $region16: #{tpu_custom_call.1} parent=1 // pred_region
      _
    $region17: #{tpu_custom_call.1} parent=1 // pred_fallthru
      _
    // Predicated region
    $region18: #{tpu_custom_call.1} parent=1 // pred_check
      _
    $region19: #{tpu_custom_call.1} parent=1 // pred_check_branch
      %53 = sbr.rel (0) target = $region21
    $region20: #{tpu_custom_call.1} parent=1 // pred_region
      _
    $region21: #{tpu_custom_call.1} parent=1 // pred_fallthru
      _
    // Predicated region
    $region22: #{tpu_custom_call.1} parent=1 // pred_check
      _
    $region23: #{tpu_custom_call.1} parent=1 // pred_check_branch
      %55 = sbr.rel (0) target = $region25
    $region24: #{tpu_custom_call.1} parent=1 // pred_region
      _
    $region25: #{tpu_custom_call.1} parent=1 // pred_fallthru
      _
    // Predicated region
    $region26: #{tpu_custom_call.1} parent=1 // pred_check
      _
    $region27: #{tpu_custom_call.1} parent=1 // pred_check_branch
      %57 = sbr.rel (0) target = $region29
    $region28: #{tpu_custom_call.1} parent=1 // pred_region
      %58 = dma.done [#allocation3], 256
    $region29: #{tpu_custom_call.1} parent=1 // pred_fallthru
      _
    // Predicated region
    $region30: #{tpu_custom_call.1} parent=1 // pred_check
      _
    $region31: #{tpu_custom_call.1} parent=1 // pred_check_branch
      %60 = sbr.rel (0) target = $region33
    $region32: #{tpu_custom_call.1} parent=1 // pred_region
      %61 = dma.done [#allocation6], 256
    $region33: #{tpu_custom_call.1} parent=1 // pred_fallthru
      _
    // Predicated region
    $region34: #{tpu_custom_call.1} parent=1 // pred_check
      _
    $region35: #{tpu_custom_call.1} parent=1 // pred_check_branch
      %63 = sbr.rel (0) target = $region37
    $region36: #{tpu_custom_call.1} parent=1 // pred_region
      %64 = dma.done [#allocation6], 2048
    $region37: #{tpu_custom_call.1} parent=1 // pred_fallthru
      _
    %v65 = vld [vmem:[#allocation2] sm:$0xff]
    %v66 = vld [vmem:[#allocation2 + $0x8] sm:$0xff]
    %v67 = vld [vmem:[#allocation7] sm:$0xff]
    %v68 = vld [vmem:[#allocation7 + $0x8] sm:$0xff]
    %v69 = vld [vmem:[#allocation7 + $0x10] sm:$0xff]
    %v70 = vld [vmem:[#allocation7 + $0x18] sm:$0xff]
    %v71 = vld [vmem:[#allocation7 + $0x20] sm:$0xff]
    %v72 = vld [vmem:[#allocation7 + $0x28] sm:$0xff]
    %v73 = vld [vmem:[#allocation7 + $0x30] sm:$0xff]
    %v74 = vld [vmem:[#allocation7 + $0x38] sm:$0xff]
    %v75 = vld [vmem:[#allocation7 + $0x40] sm:$0xff]
    %v76 = vld [vmem:[#allocation7 + $0x48] sm:$0xff]
    %v77 = vld [vmem:[#allocation7 + $0x50] sm:$0xff]
    %v78 = vld [vmem:[#allocation7 + $0x58] sm:$0xff]
    %v79 = vld [vmem:[#allocation7 + $0x60] sm:$0xff]
    %v80 = vld [vmem:[#allocation7 + $0x68] sm:$0xff]
    %v81 = vld [vmem:[#allocation7 + $0x70] sm:$0xff]
    %v82 = vld [vmem:[#allocation7 + $0x78] sm:$0xff]
    %v83 = vld [vmem:[%s3] sm:$0x1]
    %v85 = vlaneseq
    %v86 = vshrl.u32 %v85, 7
    %v87 = vsub.s32 0, %v86
    %v88 = vrot.slane %v83, %v87
    %90 = vmatprep.subr.mxu0 0.0
    %91 = vmatpush1.msra.mxu0 %v67
    %92 = vmatprep.subr.mxu0 0.0
    %93 = vmatpush1.msra.mxu0 %v68
    %94 = vmatprep.subr.mxu0 0.0
    %95 = vmatpush1.msra.mxu0 %v69
    %96 = vmatprep.subr.mxu0 0.0
    %97 = vmatpush1.msra.mxu0 %v70
    %98 = vmatprep.subr.mxu0 0.0
    %99 = vmatpush1.msra.mxu0 %v71
    %100 = vmatprep.subr.mxu0 0.0
    %101 = vmatpush1.msra.mxu0 %v72
    %102 = vmatprep.subr.mxu0 0.0
    %103 = vmatpush1.msra.mxu0 %v73
    %104 = vmatprep.subr.mxu0 0.0
    %105 = vmatpush1.msra.mxu0 %v74
    %106 = vmatprep.subr.mxu0 0.0
    %107 = vmatpush1.msra.mxu0 %v75
    %108 = vmatprep.subr.mxu0 0.0
    %109 = vmatpush1.msra.mxu0 %v76
    %110 = vmatprep.subr.mxu0 0.0
    %111 = vmatpush1.msra.mxu0 %v77
    %112 = vmatprep.subr.mxu0 0.0
    %113 = vmatpush1.msra.mxu0 %v78
    %114 = vmatprep.subr.mxu0 0.0
    %115 = vmatpush1.msra.mxu0 %v79
    %116 = vmatprep.subr.mxu0 0.0
    %117 = vmatpush1.msra.mxu0 %v80
    %118 = vmatprep.subr.mxu0 0.0
    %119 = vmatpush1.msra.mxu0 %v81
    %120 = vmatprep.subr.mxu0 0.0
    %121 = vmatpush1.msra.mxu0 %v82
    %122 = vmatprep.subr.mxu0 0.0
    %123 = vmatpush1.msra.mxu0 0.0
    %124 = vmatprep.subr.mxu0 0.0
    %125 = vmatpush1.msra.mxu0 0.0
    %126 = vmatprep.subr.mxu0 0.0
    %127 = vmatpush1.msra.mxu0 0.0
    %128 = vmatprep.subr.mxu0 0.0
    %129 = vmatpush1.msra.mxu0 0.0
    %130 = vmatprep.subr.mxu0 0.0
    %131 = vmatpush1.msra.mxu0 0.0
    %132 = vmatprep.subr.mxu0 0.0
    %133 = vmatpush1.msra.mxu0 0.0
    %134 = vmatprep.subr.mxu0 0.0
    %135 = vmatpush1.msra.mxu0 0.0
    %136 = vmatprep.subr.mxu0 0.0
    %137 = vmatpush1.msra.mxu0 0.0
    %138 = vmatprep.subr.mxu0 0.0
    %139 = vmatpush1.msra.mxu0 0.0
    %140 = vmatprep.subr.mxu0 0.0
    %141 = vmatpush1.msra.mxu0 0.0
    %142 = vmatprep.subr.mxu0 0.0
    %143 = vmatpush1.msra.mxu0 0.0
    %144 = vmatprep.subr.mxu0 0.0
    %145 = vmatpush1.msra.mxu0 0.0
    %146 = vmatprep.subr.mxu0 0.0
    %147 = vmatpush1.msra.mxu0 0.0
    %148 = vmatprep.subr.mxu0 0.0
    %149 = vmatpush1.msra.mxu0 0.0
    %150 = vmatprep.subr.mxu0 0.0
    %151 = vmatpush1.msra.mxu0 0.0
    %152 = vmatprep.subr.mxu0 0.0
    %153 = vmatpush1.msra.mxu0 0.0
    %154 = vmatprep.mubr.f32.mxu0 0.0
    %155 = vmatmul.mubr.f32.gmra.mrb[0].mxu0 %v65
    %v156 = vpop.f32.mrb[0].mxu0
    %v157 = vadd.f32 %v88, %v156
    %v158 = vpop.f32.mrb[0].mxu0
    %159 = vmatprep.mubr.f32.mxu0 0.0
    %160 = vmatmul.mubr.f32.gmra.mrb[0].mxu0 %v66
    %v161 = vpop.f32.mrb[0].mxu0
    %v162 = vadd.f32 %v88, %v161
    %v163 = vpop.f32.mrb[0].mxu0
    %164 = vdwg.mxu0
    %v165 = vld [vmem:[#allocation5] sm:$0xff]
    %v166 = vld [vmem:[#allocation5 + $0x8] sm:$0xff]
    %v167 = vadd.f32 %v157, %v165
    %v168 = vadd.f32 %v162, %v166
    %169 = vadd.xlane.f32.xlu0 %v167
    %v170 = vpop.xlane.xlu0 %169
    %171 = vadd.xlane.f32.xlu0 %v168
    %v172 = vpop.xlane.xlu0 %171
    %v173 = vmul.f32 %v170, 0.03125
    %v174 = vmul.f32 %v172, 0.03125
    %v175 = vsub.f32 %v167, %v173
    %v176 = vsub.f32 %v168, %v174
    %v177 = vlaneseq
    %v178 = vand.u32 %v177, 127
    %vm179 = vcmp.lt.s32.totalorder %v178, 32
    %v180 = vmul.f32 %v175, %v175
    %v181 = vmul.f32 %v176, %v176
    %v182 = vsel %vm179, %v180, 0.0
    %v183 = vsel %vm179, %v181, 0.0
    %184 = vadd.xlane.f32.xlu0 %v182
    %v185 = vpop.xlane.xlu0 %184
    %186 = vadd.xlane.f32.xlu0 %v183
    %v187 = vpop.xlane.xlu0 %186
    %v188 = vmul.f32 %v185, 0.03125
    %v189 = vmul.f32 %v187, 0.03125
    %v190 = vld [vmem:[%s4] sm:$0x1]
    %v191 = vadd.f32 %v188, 1e-12
    %v192 = vadd.f32 %v189, 1e-12
    %v193 = vrsqrt.pop %v191
    %v194 = vrsqrt.pop %v192
    %v196 = vlaneseq
    %v197 = vshrl.u32 %v196, 7
    %v198 = vsub.s32 0, %v197
    %v199 = vrot.slane %v190, %v198
    %v201 = vmul.f32 %v199, %v193
    %v202 = vmul.f32 %v199, %v194
    %v203 = vmul.f32 %v175, %v201
    %v204 = vmul.f32 %v176, %v202
    %v205 = vld [vmem:[%s5] sm:$0x1]
    %v207 = vlaneseq
    %v208 = vshrl.u32 %v207, 7
    %v209 = vsub.s32 0, %v208
    %v210 = vrot.slane %v205, %v209
    %v212 = vadd.f32 %v203, %v210
    %v213 = vadd.f32 %v204, %v210
    %214 = vst [vmem:[#allocation8] sm:$0xff] %v212
    %215 = vst [vmem:[#allocation8 + $0x8] sm:$0xff] %v213
    // Predicated region
    $region38: #{tpu_custom_call.1} parent=1 // pred_check
      _
    $region39: #{tpu_custom_call.1} parent=1 // pred_check_branch
      %217 = sbr.rel (0) target = $region41
    $region40: #{tpu_custom_call.1} parent=1 // pred_region
      %s219 = ssub.s32 256, 256
      %220 = vsyncadd [#allocation4], %s219
      %s221 = sshll.u32 [#allocation8], 4
      %s222 = int_to_ptr.vmem [resolvable:$true] %s221
      %227 = dma.vmem_to_hbm [thread:$0]  %s222, 256, %s6, [#allocation4], 128, 128, 8
    $region41: #{tpu_custom_call.1} parent=1 // pred_fallthru
      _
    // Predicated region
    $region42: #{tpu_custom_call.1} parent=1 // pred_check
      _
    $region43: #{tpu_custom_call.1} parent=1 // pred_check_branch
      %229 = sbr.rel (0) target = $region45
    $region44: #{tpu_custom_call.1} parent=1 // pred_region
      %230 = dma.done [#allocation4], 256
    $region45: #{tpu_custom_call.1} parent=1 // pred_fallthru
      _
    %231 = vsyncpa [#allocation3], 1
    %232 = vsyncpa [#allocation6], 1
    %233 = vsyncpa [#allocation4], 1

</llo_original>
